<compile_context>
chip_gen: v6e
topology: v6e:2x2x1
jax: 0.10.0
libtpu: 0.0.40
codegen_flags: <defaults>
</compile_context>

<pallas_src>
import jax
import jax.numpy as jnp
from jax.experimental import pallas as pl
from jax.experimental.pallas import tpu as pltpu

INPUT_DIM1 = 32   # features consumed by the encoder
INPUT_DIM2 = 44   # features entering the GNN (= 32 encoded + 12 raw)
HIDDEN_DIM1 = 32
HIDDEN_DIM2 = 32
OUTPUT_DIM1 = 32
OUTPUT_DIM2 = 12

X_PAD_COLS = 64      # x1 (32) | x2 (12) | zero pad (20)
OUT_PAD_COLS = 128   # lane-dense output; real data in cols 0:12


def _round_up(v, m):
    return (v + m - 1) // m * m


# ----------------------------------------------------------------------------
# Kernel
# ----------------------------------------------------------------------------
def _pggcn_kernel(x_ref, a_ref, w_ref, wg3_ref, b_ref, out_ref):
    f32 = jnp.float32
    bf16 = jnp.bfloat16

    # Packed inputs (all bf16 except the bias slab).
    x1 = x_ref[:, 0:32]           # [NP, 32] encoder input
    x2 = x_ref[:, 32:64]          # [NP, 32] raw pass-through (cols 12:32 are zero)
    a = a_ref[...]                # [NP, NP] normalized adjacency (with self loops)

    w1 = w_ref[0:32, :]           # Linear 32->32
    w2 = w_ref[32:64, :]          # Linear 32->32
    wg1a = w_ref[64:96, :]        # GCN1 weight rows acting on encoded features
    wg1b = w_ref[96:128, :]       # GCN1 weight rows acting on raw features (rows 12:32 zero)
    wg2 = w_ref[128:160, :]       # GCN2 weight
    wg3 = wg3_ref[...]            # [32, 128] GCN3 weight (cols 12:128 zero)

    b1 = b_ref[0:1, 0:32]
    b2 = b_ref[1:2, 0:32]
    bg1 = b_ref[2:3, 0:32]
    bg2 = b_ref[3:4, 0:32]
    bg3 = b_ref[4:5, :]           # [1, 128] (cols 12:128 zero)

    # --- encoder: Linear -> ReLU -> Linear -> ReLU (bias/ReLU in f32)
    h = jnp.maximum(jnp.dot(x1, w1, preferred_element_type=f32) + b1, 0.0)
    temp = jnp.maximum(
        jnp.dot(h.astype(bf16), w2, preferred_element_type=f32) + b2, 0.0)

    # --- GCN layer 1: GCNConv(44 -> 32) + ReLU
    # concat([temp, x2]) @ wg1 is fused as a split matmul (no lane concat).
    z = (jnp.dot(temp.astype(bf16), wg1a, preferred_element_type=f32)
         + jnp.dot(x2, wg1b, preferred_element_type=f32))
    h = jnp.maximum(jnp.dot(a, z.astype(bf16), preferred_element_type=f32) + bg1, 0.0)

    # --- GCN layer 2: GCNConv(32 -> 32) + ReLU
    z = jnp.dot(h.astype(bf16), wg2, preferred_element_type=f32)
    h = jnp.maximum(jnp.dot(a, z.astype(bf16), preferred_element_type=f32) + bg2, 0.0)

    # --- GCN layer 3: GCNConv(32 -> 12), no activation.
    # Output padded to 128 lanes so the store path is unmasked / lane-dense.
    z = jnp.dot(h.astype(bf16), wg3, preferred_element_type=f32)
    out_ref[...] = jnp.dot(a, z.astype(bf16), preferred_element_type=f32) + bg3


# ----------------------------------------------------------------------------
# Parameter / graph helpers
# ----------------------------------------------------------------------------
def init_params(key):
    """Deterministic synthetic parameters (same shapes as the PyTorch module)."""
    ks = jax.random.split(key, 5)

    def linear(k, fan_in, fan_out):
        # PyTorch nn.Linear default init: U(-1/sqrt(fan_in), 1/sqrt(fan_in)).
        kw, kb = jax.random.split(k)
        bound = 1.0 / jnp.sqrt(jnp.float32(fan_in))
        w = jax.random.uniform(kw, (fan_in, fan_out), jnp.float32, -bound, bound)
        b = jax.random.uniform(kb, (1, fan_out), jnp.float32, -bound, bound)
        return w, b

    def gcn(k, fan_in, fan_out):
        # PyG GCNConv default: glorot weight, zero bias.
        limit = jnp.sqrt(6.0 / jnp.float32(fan_in + fan_out))
        w = jax.random.uniform(k, (fan_in, fan_out), jnp.float32, -limit, limit)
        b = jnp.zeros((1, fan_out), jnp.float32)
        return w, b

    w1, b1 = linear(ks[0], INPUT_DIM1, HIDDEN_DIM1)
    w2, b2 = linear(ks[1], HIDDEN_DIM1, OUTPUT_DIM1)
    wg1, bg1 = gcn(ks[2], INPUT_DIM2, HIDDEN_DIM2)
    wg2, bg2 = gcn(ks[3], HIDDEN_DIM2, HIDDEN_DIM2)
    wg3, bg3 = gcn(ks[4], HIDDEN_DIM2, OUTPUT_DIM2)
    return dict(w1=w1, b1=b1, w2=w2, b2=b2,
                wg1=wg1, bg1=bg1, wg2=wg2, bg2=bg2, wg3=wg3, bg3=bg3)


def build_a_hat(edge_index, num_nodes):
    """Dense D^-1/2 (A + I) D^-1/2, A[dst, src] = 1 (PyG gcn_norm, edge weight 1).

    Note: a self-loop of weight 1 is added unconditionally; edge_index is
    assumed not to already contain self-loops (matches add_self_loops usage).
    """
    src = edge_index[0]
    dst = edge_index[1]
    a = jnp.zeros((num_nodes, num_nodes), jnp.float32).at[dst, src].add(1.0)
    a = a + jnp.eye(num_nodes, dtype=jnp.float32)
    deg = a.sum(axis=1)
    dinv = jax.lax.rsqrt(deg)
    return dinv[:, None] * a * dinv[None, :]


def _pack_inputs(x, edge_index, params):
    """Pad node dim to a multiple of 128, coalesce params into 3 VMEM slabs."""
    n = x.shape[0]
    npad = _round_up(max(n, 1), 128)
    f32 = jnp.float32
    bf16 = jnp.bfloat16

    # Padded normalized adjacency (zero rows/cols for padded nodes).
    a = build_a_hat(edge_index, n)
    a_pad = jnp.zeros((npad, npad), f32).at[:n, :n].set(a).astype(bf16)

    # Padded features: [x1 | x2 | zeros] -> [npad, 64].
    x = x.astype(f32)
    x_pad = jnp.zeros((npad, X_PAD_COLS), f32).at[:n, :INPUT_DIM2].set(x)
    x_pad = x_pad.astype(bf16)

    # Weight slab [160, 32]: w1 | w2 | wg1a | wg1b(zero-padded to 32 rows) | wg2.
    wg1 = params["wg1"]
    wg1a = wg1[:OUTPUT_DIM1]                                     # [32, 32]
    wg1b = jnp.zeros((32, HIDDEN_DIM2), f32).at[
        :INPUT_DIM2 - OUTPUT_DIM1].set(wg1[OUTPUT_DIM1:])        # [32, 32]
    w_slab = jnp.concatenate(
        [params["w1"], params["w2"], wg1a, wg1b, params["wg2"]], axis=0
    ).astype(bf16)                                               # [160, 32]

    # GCN3 weight, lane-dense padded: [32, 128] (cols 12:128 zero).
    wg3_pad = jnp.zeros((HIDDEN_DIM2, OUT_PAD_COLS), f32).at[
        :, :OUTPUT_DIM2].set(params["wg3"]).astype(bf16)

    # Bias slab [8, 128] f32 (one vreg): rows 0..4 = b1, b2, bg1, bg2, bg3.
    b_slab = jnp.zeros((8, OUT_PAD_COLS), f32)
    b_slab = b_slab.at[0, :HIDDEN_DIM1].set(params["b1"].reshape(-1))
    b_slab = b_slab.at[1, :OUTPUT_DIM1].set(params["b2"].reshape(-1))
    b_slab = b_slab.at[2, :HIDDEN_DIM2].set(params["bg1"].reshape(-1))
    b_slab = b_slab.at[3, :HIDDEN_DIM2].set(params["bg2"].reshape(-1))
    b_slab = b_slab.at[4, :OUTPUT_DIM2].set(params["bg3"].reshape(-1))

    return x_pad, a_pad, w_slab, wg3_pad, b_slab, npad


# ----------------------------------------------------------------------------
# Wrapper
# ----------------------------------------------------------------------------
@jax.jit
def pggcn_forward(x, edge_index, params):
    n = x.shape[0]
    x_pad, a_pad, w_slab, wg3_pad, b_slab, npad = _pack_inputs(x, edge_index, params)

    # Advisory cost for XLA scheduling around the custom call.
    flops = 2 * npad * (5 * 32 * 32 + 32 * 128) + 2 * npad * npad * (32 + 32 + 128)
    bytes_accessed = (x_pad.size * 2 + a_pad.size * 2 + w_slab.size * 2
                      + wg3_pad.size * 2 + b_slab.size * 4
                      + npad * OUT_PAD_COLS * 4)

    vmem_spec = pl.BlockSpec(memory_space=pltpu.MemorySpace.VMEM)
    out_pad = pl.pallas_call(
        _pggcn_kernel,
        out_shape=jax.ShapeDtypeStruct((npad, OUT_PAD_COLS), jnp.float32),
        in_specs=[vmem_spec] * 5,
        out_specs=vmem_spec,
        cost_estimate=pl.CostEstimate(
            flops=flops, transcendentals=0, bytes_accessed=bytes_accessed),
    )(x_pad, a_pad, w_slab, wg3_pad, b_slab)

    return out_pad[:n, :OUTPUT_DIM2]


# ----------------------------------------------------------------------------
# References (for sanity checks)
# ----------------------------------------------------------------------------
def reference_forward(x, edge_index, params):
    """Pure f32 plain-JAX reference of the original module math."""
    a_hat = build_a_hat(edge_index, x.shape[0])
    x1 = x[:, :INPUT_DIM1]
    x2 = x[:, INPUT_DIM1:]
    h = jnp.maximum(x1 @ params["w1"] + params["b1"], 0.0)
    temp = jnp.maximum(h @ params["w2"] + params["b2"], 0.0)
    xc = jnp.concatenate([temp, x2], axis=1)
    h = jnp.maximum(a_hat @ (xc @ params["wg1"]) + params["bg1"], 0.0)
    h = jnp.maximum(a_hat @ (h @ params["wg2"]) + params["bg2"], 0.0)
    return a_hat @ (h @ params["wg3"]) + params["bg3"]


def reference_padded_bf16(x_pad, a_pad, w_slab, wg3_pad, b_slab):
    """Plain-JAX mirror of the kernel math (same bf16 rounding) for tight check."""
    f32 = jnp.float32
    bf16 = jnp.bfloat16
    dot = lambda p, q: jnp.dot(p, q, preferred_element_type=f32)

    x1, x2 = x_pad[:, 0:32], x_pad[:, 32:64]
    w1, w2 = w_slab[0:32], w_slab[32:64]
    wg1a, wg1b, wg2 = w_slab[64:96], w_slab[96:128], w_slab[128:160]
    b1, b2 = b_slab[0:1, 0:32], b_slab[1:2, 0:32]
    bg1, bg2, bg3 = b_slab[2:3, 0:32], b_slab[3:4, 0:32], b_slab[4:5, :]

    h = jnp.maximum(dot(x1, w1) + b1, 0.0)
    temp = jnp.maximum(dot(h.astype(bf16), w2) + b2, 0.0)
    z = dot(temp.astype(bf16), wg1a) + dot(x2, wg1b)
    h = jnp.maximum(dot(a_pad, z.astype(bf16)) + bg1, 0.0)
    z = dot(h.astype(bf16), wg2)
    h = jnp.maximum(dot(a_pad, z.astype(bf16)) + bg2, 0.0)
    z = dot(h.astype(bf16), wg3_pad)
    return dot(a_pad, z.astype(bf16)) + bg3


if __name__ == "__main__":
    key = jax.random.PRNGKey(0)
    k_x, k_p = jax.random.split(key)

    # IEEE Case 118: 118 bus nodes, 44 features per node.
    N = 118
    x = jax.random.normal(k_x, (N, INPUT_DIM2), dtype=jnp.float32)

    # Deterministic bidirectional ring graph (no self loops, no duplicates).
    idx = jnp.arange(N, dtype=jnp.int32)
    nxt = (idx + 1) % N
    edge_index = jnp.stack([jnp.concatenate([idx, nxt]),
                            jnp.concatenate([nxt, idx])], axis=0)  # [2, 2N]

    params = init_params(k_p)

    out = pggcn_forward(x, edge_index, params)
    out = jax.block_until_ready(out)
    assert out.shape == (N, OUTPUT_DIM2)

    # Tight check: kernel vs plain-JAX with identical bf16 rounding/padding.
    packed = _pack_inputs(x, edge_index, params)
    ref_bf16 = reference_padded_bf16(*packed[:-1])[:N, :OUTPUT_DIM2]
    assert jnp.allclose(out, ref_bf16, rtol=2e-3, atol=2e-3)

    # Loose check: kernel (bf16 MXU inputs) vs pure-f32 module math.
    ref_f32 = reference_forward(x, edge_index, params)
    assert jnp.allclose(out, ref_f32, rtol=5e-2, atol=5e-2)

    print("KERNEL_OK")
</pallas_src>

<mosaic_0001>
module attributes {stable_mosaic.version = 11 : i64} {
  func.func @_pggcn_kernel(%arg0: memref<128x64xbf16, #tpu.memory_space<vmem>>, %arg1: memref<128x128xbf16, #tpu.memory_space<vmem>>, %arg2: memref<160x32xbf16, #tpu.memory_space<vmem>>, %arg3: memref<32x128xbf16, #tpu.memory_space<vmem>>, %arg4: memref<8x128xf32, #tpu.memory_space<vmem>>, %arg5: memref<128x128xf32, #tpu.memory_space<vmem>>) attributes {dimension_semantics = [], scalar_prefetch = 0 : i64, scratch_operands = 0 : i64, tpu.core_type = #tpu.core_type<tc>} {
    %c0 = arith.constant 0 : index
    %c0_0 = arith.constant 0 : index
    %0 = vector.load %arg0[%c0, %c0_0] : memref<128x64xbf16, #tpu.memory_space<vmem>>, vector<128x32xbf16>
    %c0_1 = arith.constant 0 : index
    %c32 = arith.constant 32 : index
    %1 = vector.load %arg0[%c0_1, %c32] : memref<128x64xbf16, #tpu.memory_space<vmem>>, vector<128x32xbf16>
    %c0_2 = arith.constant 0 : index
    %c0_3 = arith.constant 0 : index
    %2 = vector.load %arg1[%c0_2, %c0_3] : memref<128x128xbf16, #tpu.memory_space<vmem>>, vector<128x128xbf16>
    %c0_4 = arith.constant 0 : index
    %c0_5 = arith.constant 0 : index
    %3 = vector.load %arg2[%c0_4, %c0_5] : memref<160x32xbf16, #tpu.memory_space<vmem>>, vector<32x32xbf16>
    %c32_6 = arith.constant 32 : index
    %c0_7 = arith.constant 0 : index
    %4 = vector.load %arg2[%c32_6, %c0_7] : memref<160x32xbf16, #tpu.memory_space<vmem>>, vector<32x32xbf16>
    %c64 = arith.constant 64 : index
    %c0_8 = arith.constant 0 : index
    %5 = vector.load %arg2[%c64, %c0_8] : memref<160x32xbf16, #tpu.memory_space<vmem>>, vector<32x32xbf16>
    %c96 = arith.constant 96 : index
    %c0_9 = arith.constant 0 : index
    %6 = vector.load %arg2[%c96, %c0_9] : memref<160x32xbf16, #tpu.memory_space<vmem>>, vector<32x32xbf16>
    %c128 = arith.constant 128 : index
    %c0_10 = arith.constant 0 : index
    %7 = vector.load %arg2[%c128, %c0_10] : memref<160x32xbf16, #tpu.memory_space<vmem>>, vector<32x32xbf16>
    %c0_11 = arith.constant 0 : index
    %c0_12 = arith.constant 0 : index
    %8 = vector.load %arg3[%c0_11, %c0_12] : memref<32x128xbf16, #tpu.memory_space<vmem>>, vector<32x128xbf16>
    %c0_13 = arith.constant 0 : index
    %c0_14 = arith.constant 0 : index
    %9 = vector.load %arg4[%c0_13, %c0_14] : memref<8x128xf32, #tpu.memory_space<vmem>>, vector<1x32xf32>
    %c1 = arith.constant 1 : index
    %c0_15 = arith.constant 0 : index
    %10 = vector.load %arg4[%c1, %c0_15] : memref<8x128xf32, #tpu.memory_space<vmem>>, vector<1x32xf32>
    %c2 = arith.constant 2 : index
    %c0_16 = arith.constant 0 : index
    %11 = vector.load %arg4[%c2, %c0_16] : memref<8x128xf32, #tpu.memory_space<vmem>>, vector<1x32xf32>
    %c3 = arith.constant 3 : index
    %c0_17 = arith.constant 0 : index
    %12 = vector.load %arg4[%c3, %c0_17] : memref<8x128xf32, #tpu.memory_space<vmem>>, vector<1x32xf32>
    %c4 = arith.constant 4 : index
    %c0_18 = arith.constant 0 : index
    %13 = vector.load %arg4[%c4, %c0_18] : memref<8x128xf32, #tpu.memory_space<vmem>>, vector<1x128xf32>
    %cst = arith.constant dense<0.000000e+00> : vector<128x32xf32>
    %14 = tpu.matmul %0, %3, %cst {dimension_numbers = #tpu.dot_dimension_numbers<[1], [0], [0], [1], [0, 0, 1, 1], [], []>} : vector<128x32xbf16>, vector<32x32xbf16>, vector<128x32xf32> -> vector<128x32xf32>
    %15 = vector.broadcast %9 : vector<1x32xf32> to vector<128x32xf32>
    %16 = arith.addf %14, %15 : vector<128x32xf32>
    %cst_19 = arith.constant 0.000000e+00 : f32
    %17 = vector.broadcast %cst_19 : f32 to vector<128x32xf32>
    %18 = arith.maximumf %16, %17 : vector<128x32xf32>
    %19 = arith.truncf %18 : vector<128x32xf32> to vector<128x32xbf16>
    %cst_20 = arith.constant dense<0.000000e+00> : vector<128x32xf32>
    %20 = tpu.matmul %19, %4, %cst_20 {dimension_numbers = #tpu.dot_dimension_numbers<[1], [0], [0], [1], [0, 0, 1, 1], [], []>} : vector<128x32xbf16>, vector<32x32xbf16>, vector<128x32xf32> -> vector<128x32xf32>
    %21 = vector.broadcast %10 : vector<1x32xf32> to vector<128x32xf32>
    %22 = arith.addf %20, %21 : vector<128x32xf32>
    %cst_21 = arith.constant 0.000000e+00 : f32
    %23 = vector.broadcast %cst_21 : f32 to vector<128x32xf32>
    %24 = arith.maximumf %22, %23 : vector<128x32xf32>
    %25 = arith.truncf %24 : vector<128x32xf32> to vector<128x32xbf16>
    %cst_22 = arith.constant dense<0.000000e+00> : vector<128x32xf32>
    %26 = tpu.matmul %25, %5, %cst_22 {dimension_numbers = #tpu.dot_dimension_numbers<[1], [0], [0], [1], [0, 0, 1, 1], [], []>} : vector<128x32xbf16>, vector<32x32xbf16>, vector<128x32xf32> -> vector<128x32xf32>
    %cst_23 = arith.constant dense<0.000000e+00> : vector<128x32xf32>
    %27 = tpu.matmul %1, %6, %cst_23 {dimension_numbers = #tpu.dot_dimension_numbers<[1], [0], [0], [1], [0, 0, 1, 1], [], []>} : vector<128x32xbf16>, vector<32x32xbf16>, vector<128x32xf32> -> vector<128x32xf32>
    %28 = arith.addf %26, %27 : vector<128x32xf32>
    %29 = arith.truncf %28 : vector<128x32xf32> to vector<128x32xbf16>
    %cst_24 = arith.constant dense<0.000000e+00> : vector<128x32xf32>
    %30 = tpu.matmul %2, %29, %cst_24 {dimension_numbers = #tpu.dot_dimension_numbers<[1], [0], [0], [1], [0, 0, 1, 1], [], []>} : vector<128x128xbf16>, vector<128x32xbf16>, vector<128x32xf32> -> vector<128x32xf32>
    %31 = vector.broadcast %11 : vector<1x32xf32> to vector<128x32xf32>
    %32 = arith.addf %30, %31 : vector<128x32xf32>
    %cst_25 = arith.constant 0.000000e+00 : f32
    %33 = vector.broadcast %cst_25 : f32 to vector<128x32xf32>
    %34 = arith.maximumf %32, %33 : vector<128x32xf32>
    %35 = arith.truncf %34 : vector<128x32xf32> to vector<128x32xbf16>
    %cst_26 = arith.constant dense<0.000000e+00> : vector<128x32xf32>
    %36 = tpu.matmul %35, %7, %cst_26 {dimension_numbers = #tpu.dot_dimension_numbers<[1], [0], [0], [1], [0, 0, 1, 1], [], []>} : vector<128x32xbf16>, vector<32x32xbf16>, vector<128x32xf32> -> vector<128x32xf32>
    %37 = arith.truncf %36 : vector<128x32xf32> to vector<128x32xbf16>
    %cst_27 = arith.constant dense<0.000000e+00> : vector<128x32xf32>
    %38 = tpu.matmul %2, %37, %cst_27 {dimension_numbers = #tpu.dot_dimension_numbers<[1], [0], [0], [1], [0, 0, 1, 1], [], []>} : vector<128x128xbf16>, vector<128x32xbf16>, vector<128x32xf32> -> vector<128x32xf32>
    %39 = vector.broadcast %12 : vector<1x32xf32> to vector<128x32xf32>
    %40 = arith.addf %38, %39 : vector<128x32xf32>
    %cst_28 = arith.constant 0.000000e+00 : f32
    %41 = vector.broadcast %cst_28 : f32 to vector<128x32xf32>
    %42 = arith.maximumf %40, %41 : vector<128x32xf32>
    %43 = arith.truncf %42 : vector<128x32xf32> to vector<128x32xbf16>
    %cst_29 = arith.constant dense<0.000000e+00> : vector<128x128xf32>
    %44 = tpu.matmul %43, %8, %cst_29 {dimension_numbers = #tpu.dot_dimension_numbers<[1], [0], [0], [1], [0, 0, 1, 1], [], []>} : vector<128x32xbf16>, vector<32x128xbf16>, vector<128x128xf32> -> vector<128x128xf32>
    %45 = arith.truncf %44 : vector<128x128xf32> to vector<128x128xbf16>
    %cst_30 = arith.constant dense<0.000000e+00> : vector<128x128xf32>
    %46 = tpu.matmul %2, %45, %cst_30 {dimension_numbers = #tpu.dot_dimension_numbers<[1], [0], [0], [1], [0, 0, 1, 1], [], []>} : vector<128x128xbf16>, vector<128x128xbf16>, vector<128x128xf32> -> vector<128x128xf32>
    %47 = vector.broadcast %13 : vector<1x128xf32> to vector<128x128xf32>
    %48 = arith.addf %46, %47 : vector<128x128xf32>
    %c0_31 = arith.constant 0 : index
    %c0_32 = arith.constant 0 : index
    %49 = vector.load %arg5[%c0_31, %c0_32] : memref<128x128xf32, #tpu.memory_space<vmem>>, vector<128x128xf32>
    tpu.vector_store %arg5[%c0_31, %c0_32], %48 {strides = array<i32>} : memref<128x128xf32, #tpu.memory_space<vmem>>, vector<128x128xf32>,
    return
  }
}

</mosaic_0001>

<llo_original>
// kernel: pggcn_forward.1
$region0: #{pggcn_forward.1}
  #allocation0 [shape = 'u32[]', space=smem, size = 0x4, offset = 0x4, fixed_abs, tag = 'smem constant byte address 0x4 - core index']
  #allocation1 [shape = 'u32[144,128]{1,0:T(1,128)}', space=vmem, size = 0x12000, scoped, tag = 'internal scratch']
  %s0 = inlined_call_operand.vmem [shape: bf16[128,64], index: 0, kind: input, shape index: {}]
  %s1 = inlined_call_operand.vmem [shape: bf16[128,128], index: 1, kind: input, shape index: {}]
  %s2 = inlined_call_operand.vmem [shape: bf16[160,32], index: 2, kind: input, shape index: {}]
  %s3 = inlined_call_operand.vmem [shape: bf16[32,128], index: 3, kind: input, shape index: {}]
  %s4 = inlined_call_operand.vmem [shape: f32[8,128], index: 4, kind: input, shape index: {}]
  %s5 = inlined_call_operand.vmem [shape: f32[128,128], index: 5, kind: output, shape index: {}]
  %s6 = sld [smem:[#allocation0]]
  $region30: #{pggcn_forward.1} parent=0
    _
  %s8 = ssub.s32 1, %s6
  %s9 = scalar_select 0, %s8, %s6
  // Predicated region
  $region2: #{pggcn_forward.1} parent=0 // pred_check
    _
  $region3: #{pggcn_forward.1} parent=0 // pred_check_branch
    %11 = sbr.rel (0) target = $region5
  $region4: #{pggcn_forward.1} parent=0 // pred_region
    _
  $region5: #{pggcn_forward.1} parent=0 // pred_fallthru
    _
  // Predicated region
  $region6: #{pggcn_forward.1} parent=0 // pred_check
    _
  $region7: #{pggcn_forward.1} parent=0 // pred_check_branch
    %13 = sbr.rel (0) target = $region9
  $region8: #{pggcn_forward.1} parent=0 // pred_region
    _
  $region9: #{pggcn_forward.1} parent=0 // pred_fallthru
    _
  // Predicated region
  $region10: #{pggcn_forward.1} parent=0 // pred_check
    _
  $region11: #{pggcn_forward.1} parent=0 // pred_check_branch
    %15 = sbr.rel (0) target = $region13
  $region12: #{pggcn_forward.1} parent=0 // pred_region
    _
  $region13: #{pggcn_forward.1} parent=0 // pred_fallthru
    _
  // Predicated region
  $region14: #{pggcn_forward.1} parent=0 // pred_check
    _
  $region15: #{pggcn_forward.1} parent=0 // pred_check_branch
    %17 = sbr.rel (0) target = $region17
  $region16: #{pggcn_forward.1} parent=0 // pred_region
    _
  $region17: #{pggcn_forward.1} parent=0 // pred_fallthru
    _
  // Predicated region
  $region18: #{pggcn_forward.1} parent=0 // pred_check
    _
  $region19: #{pggcn_forward.1} parent=0 // pred_check_branch
    %19 = sbr.rel (0) target = $region21
  $region20: #{pggcn_forward.1} parent=0 // pred_region
    _
  $region21: #{pggcn_forward.1} parent=0 // pred_fallthru
    _
  %v21 = vld [vmem:[%s0] sm:$0xf]
  %v22 = vld [vmem:[%s0 + $0x4] sm:$0xf]
  %v23 = vld [vmem:[%s0 + $0x8] sm:$0xf]
  %v24 = vld [vmem:[%s0 + $0xc] sm:$0xf]
  %v25 = vld [vmem:[%s0 + $0x10] sm:$0xf]
  %v26 = vld [vmem:[%s0 + $0x14] sm:$0xf]
  %v27 = vld [vmem:[%s0 + $0x18] sm:$0xf]
  %v28 = vld [vmem:[%s0 + $0x1c] sm:$0xf]
  %v29 = vld [vmem:[%s0 + $0x20] sm:$0xf]
  %v30 = vld [vmem:[%s0 + $0x24] sm:$0xf]
  %v31 = vld [vmem:[%s0 + $0x28] sm:$0xf]
  %v32 = vld [vmem:[%s0 + $0x2c] sm:$0xf]
  %v33 = vld [vmem:[%s0 + $0x30] sm:$0xf]
  %v34 = vld [vmem:[%s0 + $0x34] sm:$0xf]
  %v35 = vld [vmem:[%s0 + $0x38] sm:$0xf]
  %v36 = vld [vmem:[%s0 + $0x3c] sm:$0xf]
  %v37 = vld [vmem:[%s1] sm:$0xf]
  %v38 = vld [vmem:[%s1 + $0x4] sm:$0xf]
  %v39 = vld [vmem:[%s1 + $0x8] sm:$0xf]
  %v40 = vld [vmem:[%s1 + $0xc] sm:$0xf]
  %v41 = vld [vmem:[%s1 + $0x10] sm:$0xf]
  %v42 = vld [vmem:[%s1 + $0x14] sm:$0xf]
  %v43 = vld [vmem:[%s1 + $0x18] sm:$0xf]
  %v44 = vld [vmem:[%s1 + $0x1c] sm:$0xf]
  %v45 = vld [vmem:[%s1 + $0x20] sm:$0xf]
  %v46 = vld [vmem:[%s1 + $0x24] sm:$0xf]
  %v47 = vld [vmem:[%s1 + $0x28] sm:$0xf]
  %v48 = vld [vmem:[%s1 + $0x2c] sm:$0xf]
  %v49 = vld [vmem:[%s1 + $0x30] sm:$0xf]
  %v50 = vld [vmem:[%s1 + $0x34] sm:$0xf]
  %v51 = vld [vmem:[%s1 + $0x38] sm:$0xf]
  %v52 = vld [vmem:[%s1 + $0x3c] sm:$0xf]
  %v53 = vld [vmem:[%s2] sm:$0xf]
  %v54 = vld [vmem:[%s2 + $0x4] sm:$0xf]
  %v55 = vld [vmem:[%s2 + $0x8] sm:$0xf]
  %v56 = vld [vmem:[%s2 + $0xc] sm:$0xf]
  %v57 = vld [vmem:[%s2 + $0x10] sm:$0xf]
  %v58 = vld [vmem:[%s2 + $0x14] sm:$0xf]
  %v59 = vld [vmem:[%s2 + $0x18] sm:$0xf]
  %v60 = vld [vmem:[%s2 + $0x1c] sm:$0xf]
  %v61 = vld [vmem:[%s2 + $0x20] sm:$0xf]
  %v62 = vld [vmem:[%s2 + $0x24] sm:$0xf]
  %v63 = vld [vmem:[%s2 + $0x28] sm:$0xf]
  %v64 = vld [vmem:[%s2 + $0x2c] sm:$0xf]
  %v65 = vld [vmem:[%s2 + $0x30] sm:$0xf]
  %v66 = vld [vmem:[%s2 + $0x34] sm:$0xf]
  %v67 = vld [vmem:[%s2 + $0x38] sm:$0xf]
  %v68 = vld [vmem:[%s2 + $0x3c] sm:$0xf]
  %v69 = vld [vmem:[%s2 + $0x40] sm:$0xf]
  %v70 = vld [vmem:[%s2 + $0x44] sm:$0xf]
  %v71 = vld [vmem:[%s2 + $0x48] sm:$0xf]
  %v72 = vld [vmem:[%s2 + $0x4c] sm:$0xf]
  %v73 = vld [vmem:[%s3] sm:$0xf]
  %v74 = vld [vmem:[%s3 + $0x4] sm:$0xf]
  %v75 = vld [vmem:[%s3 + $0x8] sm:$0xf]
  %v76 = vld [vmem:[%s3 + $0xc] sm:$0xf]
  %v77 = vld [vmem:[%s4] sm:$0x1]
  %v78 = vld [vmem:[%s4 + $0x1] sm:$0x1]
  %v79 = vld [vmem:[%s4 + $0x2] sm:$0x1]
  %v80 = vld [vmem:[%s4 + $0x3] sm:$0x1]
  %v81 = vld [vmem:[%s4 + $0x4] sm:$0x1]
  %v82 = vlaneseq
  %v83 = vshrl.u32 %v82, 7
  %v84 = vsub.s32 0, %v83
  %v85 = vrot.slane %v77, %v84
  %v102 = vunpack.c.l.b16 %v21
  %v103 = vunpack.c.l.b16 %v22
  %v104 = vunpack.c.l.b16 %v23
  %v105 = vunpack.c.l.b16 %v24
  %v106 = vunpack.c.l.b16 %v25
  %v107 = vunpack.c.l.b16 %v26
  %v108 = vunpack.c.l.b16 %v27
  %v109 = vunpack.c.l.b16 %v28
  %v110 = vunpack.c.l.b16 %v29
  %v111 = vunpack.c.l.b16 %v30
  %v112 = vunpack.c.l.b16 %v31
  %v113 = vunpack.c.l.b16 %v32
  %v114 = vunpack.c.l.b16 %v33
  %v115 = vunpack.c.l.b16 %v34
  %v116 = vunpack.c.l.b16 %v35
  %v117 = vunpack.c.l.b16 %v36
  %v118 = vpack.c.b16 %v103, %v102
  %v119 = vpack.c.b16 %v105, %v104
  %v120 = vpack.c.b16 %v107, %v106
  %v121 = vpack.c.b16 %v109, %v108
  %v122 = vpack.c.b16 %v111, %v110
  %v123 = vpack.c.b16 %v113, %v112
  %v124 = vpack.c.b16 %v115, %v114
  %v125 = vpack.c.b16 %v117, %v116
  %v130 = vunpack.c.l.b16 %v53
  %v131 = vunpack.c.l.b16 %v54
  %v132 = vunpack.c.l.b16 %v55
  %v133 = vunpack.c.l.b16 %v56
  %v134 = vpack.c.b16 %v131, %v130
  %v135 = vpack.c.b16 %v133, %v132
  %vm138 = vcmask 261120
  %v140 = vsel %vm138, %v118, 0
  %v143 = vsel %vm138, %v119, 0
  %v146 = vsel %vm138, %v120, 0
  %v149 = vsel %vm138, %v121, 0
  %v152 = vsel %vm138, %v122, 0
  %v155 = vsel %vm138, %v123, 0
  %v158 = vsel %vm138, %v124, 0
  %v161 = vsel %vm138, %v125, 0
  %163 = vmatprep.subr.bf16.mxu0 0
  %164 = vmatpush1.bf16.msra.mxu0 0
  %165 = vmatprep.subr.bf16.mxu0 0
  %166 = vmatpush1.bf16.msra.mxu0 0
  %167 = vmatprep.subr.bf16.mxu0 0
  %168 = vmatpush1.bf16.msra.mxu0 0
  %169 = vmatprep.subr.bf16.mxu0 0
  %170 = vmatpush1.bf16.msra.mxu0 0
  %171 = vmatprep.subr.bf16.mxu0 0
  %172 = vmatpush1.bf16.msra.mxu0 0
  %173 = vmatprep.subr.bf16.mxu0 0
  %174 = vmatpush1.bf16.msra.mxu0 0
  %175 = vmatprep.subr.bf16.mxu0 0
  %176 = vmatpush1.bf16.msra.mxu0 %v135
  %177 = vmatprep.subr.bf16.mxu0 0
  %178 = vmatpush1.bf16.msra.mxu0 %v134
  %179 = vmatprep.subr.bf16.mxu0 0
  %180 = vmatpush2.bf16.msra.mxu0 0
  %181 = vmatprep.subr.bf16.mxu0 0
  %182 = vmatpush2.bf16.msra.mxu0 0
  %183 = vmatprep.subr.bf16.mxu0 0
  %184 = vmatpush2.bf16.msra.mxu0 0
  %185 = vmatprep.subr.bf16.mxu0 0
  %186 = vmatpush2.bf16.msra.mxu0 0
  %187 = vmatprep.subr.bf16.mxu0 0
  %188 = vmatpush2.bf16.msra.mxu0 0
  %189 = vmatprep.subr.bf16.mxu0 0
  %190 = vmatpush2.bf16.msra.mxu0 0
  %191 = vmatprep.subr.bf16.mxu0 0
  %192 = vmatpush2.bf16.msra.mxu0 0
  %193 = vmatprep.subr.bf16.mxu0 0
  %194 = vmatpush2.bf16.msra.mxu0 0
  %195 = vmatprep.mubr.bf16.mxu0 0
  %196 = vmatmul.mubr.bf16.gmra.mxu0 %v140
  %v197 = vpop.f32.mrf.mxu0
  %v198 = vadd.f32 %v85, %v197
  %v199 = vpop.f32.mrf.mxu0
  %v200 = vpop.f32.mrf.mxu0
  %v201 = vadd.f32 %v85, %v200
  %v202 = vpop.f32.mrf.mxu0
  %203 = vmatprep.mubr.bf16.mxu0 0
  %204 = vmatmul.mubr.bf16.gmra.mxu0 %v143
  %v205 = vpop.f32.mrf.mxu0
  %v206 = vadd.f32 %v85, %v205
  %v207 = vpop.f32.mrf.mxu0
  %v208 = vpop.f32.mrf.mxu0
  %v209 = vadd.f32 %v85, %v208
  %v210 = vpop.f32.mrf.mxu0
  %211 = vmatprep.mubr.bf16.mxu0 0
  %212 = vmatmul.mubr.bf16.gmra.mxu0 %v146
  %v213 = vpop.f32.mrf.mxu0
  %v214 = vadd.f32 %v85, %v213
  %v215 = vpop.f32.mrf.mxu0
  %v216 = vpop.f32.mrf.mxu0
  %v217 = vadd.f32 %v85, %v216
  %v218 = vpop.f32.mrf.mxu0
  %219 = vmatprep.mubr.bf16.mxu0 0
  %220 = vmatmul.mubr.bf16.gmra.mxu0 %v149
  %v221 = vpop.f32.mrf.mxu0
  %v222 = vadd.f32 %v85, %v221
  %v223 = vpop.f32.mrf.mxu0
  %v224 = vpop.f32.mrf.mxu0
  %v225 = vadd.f32 %v85, %v224
  %v226 = vpop.f32.mrf.mxu0
  %227 = vmatprep.mubr.bf16.mxu0 0
  %228 = vmatmul.mubr.bf16.gmra.mxu0 %v152
  %v229 = vpop.f32.mrf.mxu0
  %v230 = vadd.f32 %v85, %v229
  %v231 = vpop.f32.mrf.mxu0
  %v232 = vpop.f32.mrf.mxu0
  %v233 = vadd.f32 %v85, %v232
  %v234 = vpop.f32.mrf.mxu0
  %235 = vmatprep.mubr.bf16.mxu0 0
  %236 = vmatmul.mubr.bf16.gmra.mxu0 %v155
  %v237 = vpop.f32.mrf.mxu0
  %v238 = vadd.f32 %v85, %v237
  %v239 = vpop.f32.mrf.mxu0
  %v240 = vpop.f32.mrf.mxu0
  %v241 = vadd.f32 %v85, %v240
  %v242 = vpop.f32.mrf.mxu0
  %243 = vmatprep.mubr.bf16.mxu0 0
  %244 = vmatmul.mubr.bf16.gmra.mxu0 %v158
  %v245 = vpop.f32.mrf.mxu0
  %v246 = vadd.f32 %v85, %v245
  %v247 = vpop.f32.mrf.mxu0
  %v248 = vpop.f32.mrf.mxu0
  %v249 = vadd.f32 %v85, %v248
  %v250 = vpop.f32.mrf.mxu0
  %251 = vmatprep.mubr.bf16.mxu0 0
  %252 = vmatmul.mubr.bf16.gmra.mxu0 %v161
  %v253 = vpop.f32.mrf.mxu0
  %v254 = vadd.f32 %v85, %v253
  %v255 = vpop.f32.mrf.mxu0
  %v256 = vpop.f32.mrf.mxu0
  %v257 = vadd.f32 %v85, %v256
  %v258 = vpop.f32.mrf.mxu0
  %259 = vdwg.mxu0
  %v260 = vmax.f32 %v198, 0.0
  %v261 = vmax.f32 %v201, 0.0
  %v262 = vmax.f32 %v206, 0.0
  %v263 = vmax.f32 %v209, 0.0
  %v264 = vmax.f32 %v214, 0.0
  %v265 = vmax.f32 %v217, 0.0
  %v266 = vmax.f32 %v222, 0.0
  %v267 = vmax.f32 %v225, 0.0
  %v268 = vmax.f32 %v230, 0.0
  %v269 = vmax.f32 %v233, 0.0
  %v270 = vmax.f32 %v238, 0.0
  %v271 = vmax.f32 %v241, 0.0
  %v272 = vmax.f32 %v246, 0.0
  %v273 = vmax.f32 %v249, 0.0
  %v274 = vmax.f32 %v254, 0.0
  %v275 = vmax.f32 %v257, 0.0
  %v276 = vpack.c.bf16 %v261, %v260
  %v277 = vpack.c.bf16 %v263, %v262
  %v278 = vpack.c.bf16 %v265, %v264
  %v279 = vpack.c.bf16 %v267, %v266
  %v280 = vpack.c.bf16 %v269, %v268
  %v281 = vpack.c.bf16 %v271, %v270
  %v282 = vpack.c.bf16 %v273, %v272
  %v283 = vpack.c.bf16 %v275, %v274
  %v284 = vlaneseq
  %v285 = vshrl.u32 %v284, 7
  %v286 = vsub.s32 0, %v285
  %v287 = vrot.slane %v78, %v286
  %v292 = vunpack.c.l.b16 %v57
  %v293 = vunpack.c.l.b16 %v58
  %v294 = vunpack.c.l.b16 %v59
  %v295 = vunpack.c.l.b16 %v60
  %v296 = vpack.c.b16 %v293, %v292
  %v297 = vpack.c.b16 %v295, %v294
  %v301 = vsel %vm138, %v276, 0
  %v304 = vsel %vm138, %v277, 0
  %v307 = vsel %vm138, %v278, 0
  %v310 = vsel %vm138, %v279, 0
  %v313 = vsel %vm138, %v280, 0
  %v316 = vsel %vm138, %v281, 0
  %v319 = vsel %vm138, %v282, 0
  %v322 = vsel %vm138, %v283, 0
  %324 = vmatprep.subr.bf16.mxu0 0
  %325 = vmatpush1.bf16.msra.mxu0 0
  %326 = vmatprep.subr.bf16.mxu0 0
  %327 = vmatpush1.bf16.msra.mxu0 0
  %328 = vmatprep.subr.bf16.mxu0 0
  %329 = vmatpush1.bf16.msra.mxu0 0
  %330 = vmatprep.subr.bf16.mxu0 0
  %331 = vmatpush1.bf16.msra.mxu0 0
  %332 = vmatprep.subr.bf16.mxu0 0
  %333 = vmatpush1.bf16.msra.mxu0 0
  %334 = vmatprep.subr.bf16.mxu0 0
  %335 = vmatpush1.bf16.msra.mxu0 0
  %336 = vmatprep.subr.bf16.mxu0 0
  %337 = vmatpush1.bf16.msra.mxu0 %v297
  %338 = vmatprep.subr.bf16.mxu0 0
  %339 = vmatpush1.bf16.msra.mxu0 %v296
  %340 = vmatprep.subr.bf16.mxu0 0
  %341 = vmatpush2.bf16.msra.mxu0 0
  %342 = vmatprep.subr.bf16.mxu0 0
  %343 = vmatpush2.bf16.msra.mxu0 0
  %344 = vmatprep.subr.bf16.mxu0 0
  %345 = vmatpush2.bf16.msra.mxu0 0
  %346 = vmatprep.subr.bf16.mxu0 0
  %347 = vmatpush2.bf16.msra.mxu0 0
  %348 = vmatprep.subr.bf16.mxu0 0
  %349 = vmatpush2.bf16.msra.mxu0 0
  %350 = vmatprep.subr.bf16.mxu0 0
  %351 = vmatpush2.bf16.msra.mxu0 0
  %352 = vmatprep.subr.bf16.mxu0 0
  %353 = vmatpush2.bf16.msra.mxu0 0
  %354 = vmatprep.subr.bf16.mxu0 0
  %355 = vmatpush2.bf16.msra.mxu0 0
  %356 = vmatprep.mubr.bf16.mxu0 0
  %357 = vmatmul.mubr.bf16.gmra.mxu0 %v301
  %v358 = vpop.f32.mrf.mxu0
  %v359 = vadd.f32 %v287, %v358
  %v360 = vpop.f32.mrf.mxu0
  %v361 = vpop.f32.mrf.mxu0
  %v362 = vadd.f32 %v287, %v361
  %v363 = vpop.f32.mrf.mxu0
  %364 = vmatprep.mubr.bf16.mxu0 0
  %365 = vmatmul.mubr.bf16.gmra.mxu0 %v304
  %v366 = vpop.f32.mrf.mxu0
  %v367 = vadd.f32 %v287, %v366
  %v368 = vpop.f32.mrf.mxu0
  %v369 = vpop.f32.mrf.mxu0
  %v370 = vadd.f32 %v287, %v369
  %v371 = vpop.f32.mrf.mxu0
  %372 = vmatprep.mubr.bf16.mxu0 0
  %373 = vmatmul.mubr.bf16.gmra.mxu0 %v307
  %v374 = vpop.f32.mrf.mxu0
  %v375 = vadd.f32 %v287, %v374
  %v376 = vpop.f32.mrf.mxu0
  %v377 = vpop.f32.mrf.mxu0
  %v378 = vadd.f32 %v287, %v377
  %v379 = vpop.f32.mrf.mxu0
  %380 = vmatprep.mubr.bf16.mxu0 0
  %381 = vmatmul.mubr.bf16.gmra.mxu0 %v310
  %v382 = vpop.f32.mrf.mxu0
  %v383 = vadd.f32 %v287, %v382
  %v384 = vpop.f32.mrf.mxu0
  %v385 = vpop.f32.mrf.mxu0
  %v386 = vadd.f32 %v287, %v385
  %v387 = vpop.f32.mrf.mxu0
  %388 = vmatprep.mubr.bf16.mxu0 0
  %389 = vmatmul.mubr.bf16.gmra.mxu0 %v313
  %v390 = vpop.f32.mrf.mxu0
  %v391 = vadd.f32 %v287, %v390
  %v392 = vpop.f32.mrf.mxu0
  %v393 = vpop.f32.mrf.mxu0
  %v394 = vadd.f32 %v287, %v393
  %v395 = vpop.f32.mrf.mxu0
  %396 = vmatprep.mubr.bf16.mxu0 0
  %397 = vmatmul.mubr.bf16.gmra.mxu0 %v316
  %v398 = vpop.f32.mrf.mxu0
  %v399 = vadd.f32 %v287, %v398
  %v400 = vpop.f32.mrf.mxu0
  %v401 = vpop.f32.mrf.mxu0
  %v402 = vadd.f32 %v287, %v401
  %v403 = vpop.f32.mrf.mxu0
  %404 = vmatprep.mubr.bf16.mxu0 0
  %405 = vmatmul.mubr.bf16.gmra.mxu0 %v319
  %v406 = vpop.f32.mrf.mxu0
  %v407 = vadd.f32 %v287, %v406
  %v408 = vpop.f32.mrf.mxu0
  %v409 = vpop.f32.mrf.mxu0
  %v410 = vadd.f32 %v287, %v409
  %v411 = vpop.f32.mrf.mxu0
  %412 = vmatprep.mubr.bf16.mxu0 0
  %413 = vmatmul.mubr.bf16.gmra.mxu0 %v322
  %v414 = vpop.f32.mrf.mxu0
  %v415 = vadd.f32 %v287, %v414
  %v416 = vpop.f32.mrf.mxu0
  %v417 = vpop.f32.mrf.mxu0
  %v418 = vadd.f32 %v287, %v417
  %v419 = vpop.f32.mrf.mxu0
  %420 = vdwg.mxu0
  %v421 = vmax.f32 %v359, 0.0
  %v422 = vmax.f32 %v362, 0.0
  %v423 = vmax.f32 %v367, 0.0
  %v424 = vmax.f32 %v370, 0.0
  %v425 = vmax.f32 %v375, 0.0
  %v426 = vmax.f32 %v378, 0.0
  %v427 = vmax.f32 %v383, 0.0
  %v428 = vmax.f32 %v386, 0.0
  %v429 = vmax.f32 %v391, 0.0
  %v430 = vmax.f32 %v394, 0.0
  %v431 = vmax.f32 %v399, 0.0
  %v432 = vmax.f32 %v402, 0.0
  %v433 = vmax.f32 %v407, 0.0
  %v434 = vmax.f32 %v410, 0.0
  %v435 = vmax.f32 %v415, 0.0
  %v436 = vmax.f32 %v418, 0.0
  %v437 = vpack.c.bf16 %v422, %v421
  %v438 = vpack.c.bf16 %v424, %v423
  %v439 = vpack.c.bf16 %v426, %v425
  %v440 = vpack.c.bf16 %v428, %v427
  %v441 = vpack.c.bf16 %v430, %v429
  %v442 = vpack.c.bf16 %v432, %v431
  %v443 = vpack.c.bf16 %v434, %v433
  %v444 = vpack.c.bf16 %v436, %v435
  %445 = vrot.lane.b32.xlu0 %v118, 96
  %v446 = vpop.permute.xlu0 %445
  %447 = vrot.lane.b32.xlu0 %v119, 96
  %v448 = vpop.permute.xlu0 %447
  %449 = vrot.lane.b32.xlu0 %v120, 96
  %v450 = vpop.permute.xlu0 %449
  %451 = vrot.lane.b32.xlu0 %v121, 96
  %v452 = vpop.permute.xlu0 %451
  %453 = vrot.lane.b32.xlu0 %v122, 96
  %v454 = vpop.permute.xlu0 %453
  %455 = vrot.lane.b32.xlu0 %v123, 96
  %v456 = vpop.permute.xlu0 %455
  %457 = vrot.lane.b32.xlu0 %v124, 96
  %v458 = vpop.permute.xlu0 %457
  %459 = vrot.lane.b32.xlu0 %v125, 96
  %v460 = vpop.permute.xlu0 %459
  %v465 = vunpack.c.l.b16 %v65
  %v466 = vunpack.c.l.b16 %v66
  %v467 = vunpack.c.l.b16 %v67
  %v468 = vunpack.c.l.b16 %v68
  %v469 = vpack.c.b16 %v466, %v465
  %v470 = vpack.c.b16 %v468, %v467
  %v474 = vsel %vm138, %v446, 0
  %v477 = vsel %vm138, %v448, 0
  %v480 = vsel %vm138, %v450, 0
  %v483 = vsel %vm138, %v452, 0
  %v486 = vsel %vm138, %v454, 0
  %v489 = vsel %vm138, %v456, 0
  %v492 = vsel %vm138, %v458, 0
  %v495 = vsel %vm138, %v460, 0
  %497 = vmatprep.subr.bf16.mxu0 0
  %498 = vmatpush1.bf16.msra.mxu0 0
  %499 = vmatprep.subr.bf16.mxu0 0
  %500 = vmatpush1.bf16.msra.mxu0 0
  %501 = vmatprep.subr.bf16.mxu0 0
  %502 = vmatpush1.bf16.msra.mxu0 0
  %503 = vmatprep.subr.bf16.mxu0 0
  %504 = vmatpush1.bf16.msra.mxu0 0
  %505 = vmatprep.subr.bf16.mxu0 0
  %506 = vmatpush1.bf16.msra.mxu0 0
  %507 = vmatprep.subr.bf16.mxu0 0
  %508 = vmatpush1.bf16.msra.mxu0 0
  %509 = vmatprep.subr.bf16.mxu0 0
  %510 = vmatpush1.bf16.msra.mxu0 %v470
  %511 = vmatprep.subr.bf16.mxu0 0
  %512 = vmatpush1.bf16.msra.mxu0 %v469
  %513 = vmatprep.subr.bf16.mxu0 0
  %514 = vmatpush2.bf16.msra.mxu0 0
  %515 = vmatprep.subr.bf16.mxu0 0
  %516 = vmatpush2.bf16.msra.mxu0 0
  %517 = vmatprep.subr.bf16.mxu0 0
  %518 = vmatpush2.bf16.msra.mxu0 0
  %519 = vmatprep.subr.bf16.mxu0 0
  %520 = vmatpush2.bf16.msra.mxu0 0
  %521 = vmatprep.subr.bf16.mxu0 0
  %522 = vmatpush2.bf16.msra.mxu0 0
  %523 = vmatprep.subr.bf16.mxu0 0
  %524 = vmatpush2.bf16.msra.mxu0 0
  %525 = vmatprep.subr.bf16.mxu0 0
  %526 = vmatpush2.bf16.msra.mxu0 0
  %527 = vmatprep.subr.bf16.mxu0 0
  %528 = vmatpush2.bf16.msra.mxu0 0
  %529 = vmatprep.mubr.bf16.mxu0 0
  %530 = vmatmul.mubr.bf16.gmra.mxu0 %v474
  %v531 = vpop.f32.mrf.mxu0
  %v532 = vadd.f32 0.0, %v531
  %v533 = vpop.f32.mrf.mxu0
  %v534 = vpop.f32.mrf.mxu0
  %v535 = vadd.f32 0.0, %v534
  %v536 = vpop.f32.mrf.mxu0
  %537 = vmatprep.mubr.bf16.mxu0 0
  %538 = vmatmul.mubr.bf16.gmra.mxu0 %v477
  %v539 = vpop.f32.mrf.mxu0
  %v540 = vadd.f32 0.0, %v539
  %v541 = vpop.f32.mrf.mxu0
  %v542 = vpop.f32.mrf.mxu0
  %v543 = vadd.f32 0.0, %v542
  %v544 = vpop.f32.mrf.mxu0
  %545 = vmatprep.mubr.bf16.mxu0 0
  %546 = vmatmul.mubr.bf16.gmra.mxu0 %v480
  %v547 = vpop.f32.mrf.mxu0
  %v548 = vadd.f32 0.0, %v547
  %v549 = vpop.f32.mrf.mxu0
  %v550 = vpop.f32.mrf.mxu0
  %v551 = vadd.f32 0.0, %v550
  %v552 = vpop.f32.mrf.mxu0
  %553 = vmatprep.mubr.bf16.mxu0 0
  %554 = vmatmul.mubr.bf16.gmra.mxu0 %v483
  %v555 = vpop.f32.mrf.mxu0
  %v556 = vadd.f32 0.0, %v555
  %v557 = vpop.f32.mrf.mxu0
  %v558 = vpop.f32.mrf.mxu0
  %v559 = vadd.f32 0.0, %v558
  %v560 = vpop.f32.mrf.mxu0
  %561 = vmatprep.mubr.bf16.mxu0 0
  %562 = vmatmul.mubr.bf16.gmra.mxu0 %v486
  %v563 = vpop.f32.mrf.mxu0
  %v564 = vadd.f32 0.0, %v563
  %v565 = vpop.f32.mrf.mxu0
  %v566 = vpop.f32.mrf.mxu0
  %v567 = vadd.f32 0.0, %v566
  %v568 = vpop.f32.mrf.mxu0
  %569 = vmatprep.mubr.bf16.mxu0 0
  %570 = vmatmul.mubr.bf16.gmra.mxu0 %v489
  %v571 = vpop.f32.mrf.mxu0
  %v572 = vadd.f32 0.0, %v571
  %v573 = vpop.f32.mrf.mxu0
  %v574 = vpop.f32.mrf.mxu0
  %v575 = vadd.f32 0.0, %v574
  %v576 = vpop.f32.mrf.mxu0
  %577 = vmatprep.mubr.bf16.mxu0 0
  %578 = vmatmul.mubr.bf16.gmra.mxu0 %v492
  %v579 = vpop.f32.mrf.mxu0
  %v580 = vadd.f32 0.0, %v579
  %v581 = vpop.f32.mrf.mxu0
  %v582 = vpop.f32.mrf.mxu0
  %v583 = vadd.f32 0.0, %v582
  %v584 = vpop.f32.mrf.mxu0
  %585 = vmatprep.mubr.bf16.mxu0 0
  %586 = vmatmul.mubr.bf16.gmra.mxu0 %v495
  %v587 = vpop.f32.mrf.mxu0
  %v588 = vadd.f32 0.0, %v587
  %v589 = vpop.f32.mrf.mxu0
  %v590 = vpop.f32.mrf.mxu0
  %v591 = vadd.f32 0.0, %v590
  %v592 = vpop.f32.mrf.mxu0
  %593 = vdwg.mxu0
  %v598 = vunpack.c.l.b16 %v61
  %v599 = vunpack.c.l.b16 %v62
  %v600 = vunpack.c.l.b16 %v63
  %v601 = vunpack.c.l.b16 %v64
  %v602 = vpack.c.b16 %v599, %v598
  %v603 = vpack.c.b16 %v601, %v600
  %v607 = vsel %vm138, %v437, 0
  %v610 = vsel %vm138, %v438, 0
  %v613 = vsel %vm138, %v439, 0
  %v616 = vsel %vm138, %v440, 0
  %v619 = vsel %vm138, %v441, 0
  %v622 = vsel %vm138, %v442, 0
  %v625 = vsel %vm138, %v443, 0
  %v628 = vsel %vm138, %v444, 0
  %630 = vmatprep.subr.bf16.mxu0 0
  %631 = vmatpush1.bf16.msra.mxu0 0
  %632 = vmatprep.subr.bf16.mxu0 0
  %633 = vmatpush1.bf16.msra.mxu0 0
  %634 = vmatprep.subr.bf16.mxu0 0
  %635 = vmatpush1.bf16.msra.mxu0 0
  %636 = vmatprep.subr.bf16.mxu0 0
  %637 = vmatpush1.bf16.msra.mxu0 0
  %638 = vmatprep.subr.bf16.mxu0 0
  %639 = vmatpush1.bf16.msra.mxu0 0
  %640 = vmatprep.subr.bf16.mxu0 0
  %641 = vmatpush1.bf16.msra.mxu0 0
  %642 = vmatprep.subr.bf16.mxu0 0
  %643 = vmatpush1.bf16.msra.mxu0 %v603
  %644 = vmatprep.subr.bf16.mxu0 0
  %645 = vmatpush1.bf16.msra.mxu0 %v602
  %646 = vmatprep.subr.bf16.mxu0 0
  %647 = vmatpush2.bf16.msra.mxu0 0
  %648 = vmatprep.subr.bf16.mxu0 0
  %649 = vmatpush2.bf16.msra.mxu0 0
  %650 = vmatprep.subr.bf16.mxu0 0
  %651 = vmatpush2.bf16.msra.mxu0 0
  %652 = vmatprep.subr.bf16.mxu0 0
  %653 = vmatpush2.bf16.msra.mxu0 0
  %654 = vmatprep.subr.bf16.mxu0 0
  %655 = vmatpush2.bf16.msra.mxu0 0
  %656 = vmatprep.subr.bf16.mxu0 0
  %657 = vmatpush2.bf16.msra.mxu0 0
  %658 = vmatprep.subr.bf16.mxu0 0
  %659 = vmatpush2.bf16.msra.mxu0 0
  %660 = vmatprep.subr.bf16.mxu0 0
  %661 = vmatpush2.bf16.msra.mxu0 0
  %662 = vmatprep.mubr.bf16.mxu0 0
  %663 = vmatmul.mubr.bf16.gmra.mxu0 %v607
  %v664 = vpop.f32.mrf.mxu0
  %v665 = vadd.f32 %v532, %v664
  %v666 = vpop.f32.mrf.mxu0
  %v667 = vpop.f32.mrf.mxu0
  %v668 = vadd.f32 %v535, %v667
  %v669 = vpop.f32.mrf.mxu0
  %670 = vmatprep.mubr.bf16.mxu0 0
  %671 = vmatmul.mubr.bf16.gmra.mxu0 %v610
  %v672 = vpop.f32.mrf.mxu0
  %v673 = vadd.f32 %v540, %v672
  %v674 = vpop.f32.mrf.mxu0
  %v675 = vpop.f32.mrf.mxu0
  %v676 = vadd.f32 %v543, %v675
  %v677 = vpop.f32.mrf.mxu0
  %678 = vmatprep.mubr.bf16.mxu0 0
  %679 = vmatmul.mubr.bf16.gmra.mxu0 %v613
  %v680 = vpop.f32.mrf.mxu0
  %v681 = vadd.f32 %v548, %v680
  %v682 = vpop.f32.mrf.mxu0
  %v683 = vpop.f32.mrf.mxu0
  %v684 = vadd.f32 %v551, %v683
  %v685 = vpop.f32.mrf.mxu0
  %686 = vmatprep.mubr.bf16.mxu0 0
  %687 = vmatmul.mubr.bf16.gmra.mxu0 %v616
  %v688 = vpop.f32.mrf.mxu0
  %v689 = vadd.f32 %v556, %v688
  %v690 = vpop.f32.mrf.mxu0
  %v691 = vpop.f32.mrf.mxu0
  %v692 = vadd.f32 %v559, %v691
  %v693 = vpop.f32.mrf.mxu0
  %694 = vmatprep.mubr.bf16.mxu0 0
  %695 = vmatmul.mubr.bf16.gmra.mxu0 %v619
  %v696 = vpop.f32.mrf.mxu0
  %v697 = vadd.f32 %v564, %v696
  %v698 = vpop.f32.mrf.mxu0
  %v699 = vpop.f32.mrf.mxu0
  %v700 = vadd.f32 %v567, %v699
  %v701 = vpop.f32.mrf.mxu0
  %702 = vmatprep.mubr.bf16.mxu0 0
  %703 = vmatmul.mubr.bf16.gmra.mxu0 %v622
  %v704 = vpop.f32.mrf.mxu0
  %v705 = vadd.f32 %v572, %v704
  %v706 = vpop.f32.mrf.mxu0
  %v707 = vpop.f32.mrf.mxu0
  %v708 = vadd.f32 %v575, %v707
  %v709 = vpop.f32.mrf.mxu0
  %710 = vmatprep.mubr.bf16.mxu0 0
  %711 = vmatmul.mubr.bf16.gmra.mxu0 %v625
  %v712 = vpop.f32.mrf.mxu0
  %v713 = vadd.f32 %v580, %v712
  %v714 = vpop.f32.mrf.mxu0
  %v715 = vpop.f32.mrf.mxu0
  %v716 = vadd.f32 %v583, %v715
  %v717 = vpop.f32.mrf.mxu0
  %718 = vmatprep.mubr.bf16.mxu0 0
  %719 = vmatmul.mubr.bf16.gmra.mxu0 %v628
  %v720 = vpop.f32.mrf.mxu0
  %v721 = vadd.f32 %v588, %v720
  %v722 = vpop.f32.mrf.mxu0
  %v723 = vpop.f32.mrf.mxu0
  %v724 = vadd.f32 %v591, %v723
  %v725 = vpop.f32.mrf.mxu0
  %726 = vdwg.mxu0
  %v727 = vpack.c.bf16 %v668, %v665
  %v728 = vpack.c.bf16 %v676, %v673
  %v729 = vpack.c.bf16 %v684, %v681
  %v730 = vpack.c.bf16 %v692, %v689
  %v731 = vpack.c.bf16 %v700, %v697
  %v732 = vpack.c.bf16 %v708, %v705
  %v733 = vpack.c.bf16 %v716, %v713
  %v734 = vpack.c.bf16 %v724, %v721
  %v735 = vlaneseq
  %v736 = vshrl.u32 %v735, 7
  %v737 = vsub.s32 0, %v736
  %v738 = vrot.slane %v79, %v737
  %v755 = vunpack.c.l.b16 %v37
  %v756 = vunpack.c.l.b16 %v38
  %v757 = vunpack.c.l.b16 %v39
  %v758 = vunpack.c.l.b16 %v40
  %v759 = vunpack.c.l.b16 %v41
  %v760 = vunpack.c.l.b16 %v42
  %v761 = vunpack.c.l.b16 %v43
  %v762 = vunpack.c.l.b16 %v44
  %v763 = vunpack.c.l.b16 %v45
  %v764 = vunpack.c.l.b16 %v46
  %v765 = vunpack.c.l.b16 %v47
  %v766 = vunpack.c.l.b16 %v48
  %v767 = vunpack.c.l.b16 %v49
  %v768 = vunpack.c.l.b16 %v50
  %v769 = vunpack.c.l.b16 %v51
  %v770 = vunpack.c.l.b16 %v52
  %v771 = vpack.c.b16 %v756, %v755
  %v772 = vpack.c.b16 %v758, %v757
  %v773 = vpack.c.b16 %v760, %v759
  %v774 = vpack.c.b16 %v762, %v761
  %v775 = vpack.c.b16 %v764, %v763
  %v776 = vpack.c.b16 %v766, %v765
  %v777 = vpack.c.b16 %v768, %v767
  %v778 = vpack.c.b16 %v770, %v769
  %787 = vmatprep.subr.bf16.mxu0 0
  %788 = vmatpush1.bf16.msra.mxu0 %v734
  %789 = vmatprep.subr.bf16.mxu0 0
  %790 = vmatpush1.bf16.msra.mxu0 %v733
  %791 = vmatprep.subr.bf16.mxu0 0
  %792 = vmatpush1.bf16.msra.mxu0 %v732
  %793 = vmatprep.subr.bf16.mxu0 0
  %794 = vmatpush1.bf16.msra.mxu0 %v731
  %795 = vmatprep.subr.bf16.mxu0 0
  %796 = vmatpush1.bf16.msra.mxu0 %v730
  %797 = vmatprep.subr.bf16.mxu0 0
  %798 = vmatpush1.bf16.msra.mxu0 %v729
  %799 = vmatprep.subr.bf16.mxu0 0
  %800 = vmatpush1.bf16.msra.mxu0 %v728
  %801 = vmatprep.subr.bf16.mxu0 0
  %802 = vmatpush1.bf16.msra.mxu0 %v727
  %803 = vmatprep.subr.bf16.mxu0 0
  %804 = vmatpush2.bf16.msra.mxu0 0
  %805 = vmatprep.subr.bf16.mxu0 0
  %806 = vmatpush2.bf16.msra.mxu0 0
  %807 = vmatprep.subr.bf16.mxu0 0
  %808 = vmatpush2.bf16.msra.mxu0 0
  %809 = vmatprep.subr.bf16.mxu0 0
  %810 = vmatpush2.bf16.msra.mxu0 0
  %811 = vmatprep.subr.bf16.mxu0 0
  %812 = vmatpush2.bf16.msra.mxu0 0
  %813 = vmatprep.subr.bf16.mxu0 0
  %814 = vmatpush2.bf16.msra.mxu0 0
  %815 = vmatprep.subr.bf16.mxu0 0
  %816 = vmatpush2.bf16.msra.mxu0 0
  %817 = vmatprep.subr.bf16.mxu0 0
  %818 = vmatpush2.bf16.msra.mxu0 0
  %819 = vmatprep.mubr.bf16.mxu0 0
  %820 = vmatmul.mubr.bf16.gmra.mxu0 %v771
  %v821 = vpop.f32.mrf.mxu0
  %v822 = vadd.f32 %v738, %v821
  %v823 = vpop.f32.mrf.mxu0
  %v824 = vpop.f32.mrf.mxu0
  %v825 = vadd.f32 %v738, %v824
  %v826 = vpop.f32.mrf.mxu0
  %827 = vmatprep.mubr.bf16.mxu0 0
  %828 = vmatmul.mubr.bf16.gmra.mxu0 %v772
  %v829 = vpop.f32.mrf.mxu0
  %v830 = vadd.f32 %v738, %v829
  %v831 = vpop.f32.mrf.mxu0
  %v832 = vpop.f32.mrf.mxu0
  %v833 = vadd.f32 %v738, %v832
  %v834 = vpop.f32.mrf.mxu0
  %835 = vmatprep.mubr.bf16.mxu0 0
  %836 = vmatmul.mubr.bf16.gmra.mxu0 %v773
  %v837 = vpop.f32.mrf.mxu0
  %v838 = vadd.f32 %v738, %v837
  %v839 = vpop.f32.mrf.mxu0
  %v840 = vpop.f32.mrf.mxu0
  %v841 = vadd.f32 %v738, %v840
  %v842 = vpop.f32.mrf.mxu0
  %843 = vmatprep.mubr.bf16.mxu0 0
  %844 = vmatmul.mubr.bf16.gmra.mxu0 %v774
  %v845 = vpop.f32.mrf.mxu0
  %v846 = vadd.f32 %v738, %v845
  %v847 = vpop.f32.mrf.mxu0
  %v848 = vpop.f32.mrf.mxu0
  %v849 = vadd.f32 %v738, %v848
  %v850 = vpop.f32.mrf.mxu0
  %851 = vmatprep.mubr.bf16.mxu0 0
  %852 = vmatmul.mubr.bf16.gmra.mxu0 %v775
  %v853 = vpop.f32.mrf.mxu0
  %v854 = vadd.f32 %v738, %v853
  %v855 = vpop.f32.mrf.mxu0
  %v856 = vpop.f32.mrf.mxu0
  %v857 = vadd.f32 %v738, %v856
  %v858 = vpop.f32.mrf.mxu0
  %859 = vmatprep.mubr.bf16.mxu0 0
  %860 = vmatmul.mubr.bf16.gmra.mxu0 %v776
  %v861 = vpop.f32.mrf.mxu0
  %v862 = vadd.f32 %v738, %v861
  %v863 = vpop.f32.mrf.mxu0
  %v864 = vpop.f32.mrf.mxu0
  %v865 = vadd.f32 %v738, %v864
  %v866 = vpop.f32.mrf.mxu0
  %867 = vmatprep.mubr.bf16.mxu0 0
  %868 = vmatmul.mubr.bf16.gmra.mxu0 %v777
  %v869 = vpop.f32.mrf.mxu0
  %v870 = vadd.f32 %v738, %v869
  %v871 = vpop.f32.mrf.mxu0
  %v872 = vpop.f32.mrf.mxu0
  %v873 = vadd.f32 %v738, %v872
  %v874 = vpop.f32.mrf.mxu0
  %875 = vmatprep.mubr.bf16.mxu0 0
  %876 = vmatmul.mubr.bf16.gmra.mxu0 %v778
  %v877 = vpop.f32.mrf.mxu0
  %v878 = vadd.f32 %v738, %v877
  %v879 = vpop.f32.mrf.mxu0
  %v880 = vpop.f32.mrf.mxu0
  %v881 = vadd.f32 %v738, %v880
  %v882 = vpop.f32.mrf.mxu0
  %883 = vdwg.mxu0
  %v884 = vmax.f32 %v822, 0.0
  %v885 = vmax.f32 %v825, 0.0
  %v886 = vmax.f32 %v830, 0.0
  %v887 = vmax.f32 %v833, 0.0
  %v888 = vmax.f32 %v838, 0.0
  %v889 = vmax.f32 %v841, 0.0
  %v890 = vmax.f32 %v846, 0.0
  %v891 = vmax.f32 %v849, 0.0
  %v892 = vmax.f32 %v854, 0.0
  %v893 = vmax.f32 %v857, 0.0
  %v894 = vmax.f32 %v862, 0.0
  %v895 = vmax.f32 %v865, 0.0
  %v896 = vmax.f32 %v870, 0.0
  %v897 = vmax.f32 %v873, 0.0
  %v898 = vmax.f32 %v878, 0.0
  %v899 = vmax.f32 %v881, 0.0
  %v900 = vpack.c.bf16 %v885, %v884
  %v901 = vpack.c.bf16 %v887, %v886
  %v902 = vpack.c.bf16 %v889, %v888
  %v903 = vpack.c.bf16 %v891, %v890
  %v904 = vpack.c.bf16 %v893, %v892
  %v905 = vpack.c.bf16 %v895, %v894
  %v906 = vpack.c.bf16 %v897, %v896
  %v907 = vpack.c.bf16 %v899, %v898
  %v912 = vunpack.c.l.b16 %v69
  %v913 = vunpack.c.l.b16 %v70
  %v914 = vunpack.c.l.b16 %v71
  %v915 = vunpack.c.l.b16 %v72
  %v916 = vpack.c.b16 %v913, %v912
  %v917 = vpack.c.b16 %v915, %v914
  %v921 = vsel %vm138, %v900, 0
  %v924 = vsel %vm138, %v901, 0
  %v927 = vsel %vm138, %v902, 0
  %v930 = vsel %vm138, %v903, 0
  %v933 = vsel %vm138, %v904, 0
  %v936 = vsel %vm138, %v905, 0
  %v939 = vsel %vm138, %v906, 0
  %v942 = vsel %vm138, %v907, 0
  %944 = vmatprep.subr.bf16.mxu0 0
  %945 = vmatpush1.bf16.msra.mxu0 0
  %946 = vmatprep.subr.bf16.mxu0 0
  %947 = vmatpush1.bf16.msra.mxu0 0
  %948 = vmatprep.subr.bf16.mxu0 0
  %949 = vmatpush1.bf16.msra.mxu0 0
  %950 = vmatprep.subr.bf16.mxu0 0
  %951 = vmatpush1.bf16.msra.mxu0 0
  %952 = vmatprep.subr.bf16.mxu0 0
  %953 = vmatpush1.bf16.msra.mxu0 0
  %954 = vmatprep.subr.bf16.mxu0 0
  %955 = vmatpush1.bf16.msra.mxu0 0
  %956 = vmatprep.subr.bf16.mxu0 0
  %957 = vmatpush1.bf16.msra.mxu0 %v917
  %958 = vmatprep.subr.bf16.mxu0 0
  %959 = vmatpush1.bf16.msra.mxu0 %v916
  %960 = vmatprep.subr.bf16.mxu0 0
  %961 = vmatpush2.bf16.msra.mxu0 0
  %962 = vmatprep.subr.bf16.mxu0 0
  %963 = vmatpush2.bf16.msra.mxu0 0
  %964 = vmatprep.subr.bf16.mxu0 0
  %965 = vmatpush2.bf16.msra.mxu0 0
  %966 = vmatprep.subr.bf16.mxu0 0
  %967 = vmatpush2.bf16.msra.mxu0 0
  %968 = vmatprep.subr.bf16.mxu0 0
  %969 = vmatpush2.bf16.msra.mxu0 0
  %970 = vmatprep.subr.bf16.mxu0 0
  %971 = vmatpush2.bf16.msra.mxu0 0
  %972 = vmatprep.subr.bf16.mxu0 0
  %973 = vmatpush2.bf16.msra.mxu0 0
  %974 = vmatprep.subr.bf16.mxu0 0
  %975 = vmatpush2.bf16.msra.mxu0 0
  %976 = vmatprep.mubr.bf16.mxu0 0
  %977 = vmatmul.mubr.bf16.gmra.mxu0 %v921
  %v978 = vpop.f32.mrf.mxu0
  %v979 = vadd.f32 0.0, %v978
  %v980 = vpop.f32.mrf.mxu0
  %v981 = vpop.f32.mrf.mxu0
  %v982 = vadd.f32 0.0, %v981
  %v983 = vpop.f32.mrf.mxu0
  %984 = vmatprep.mubr.bf16.mxu0 0
  %985 = vmatmul.mubr.bf16.gmra.mxu0 %v924
  %v986 = vpop.f32.mrf.mxu0
  %v987 = vadd.f32 0.0, %v986
  %v988 = vpop.f32.mrf.mxu0
  %v989 = vpop.f32.mrf.mxu0
  %v990 = vadd.f32 0.0, %v989
  %v991 = vpop.f32.mrf.mxu0
  %992 = vmatprep.mubr.bf16.mxu0 0
  %993 = vmatmul.mubr.bf16.gmra.mxu0 %v927
  %v994 = vpop.f32.mrf.mxu0
  %v995 = vadd.f32 0.0, %v994
  %v996 = vpop.f32.mrf.mxu0
  %v997 = vpop.f32.mrf.mxu0
  %v998 = vadd.f32 0.0, %v997
  %v999 = vpop.f32.mrf.mxu0
  %1000 = vmatprep.mubr.bf16.mxu0 0
  %1001 = vmatmul.mubr.bf16.gmra.mxu0 %v930
  %v1002 = vpop.f32.mrf.mxu0
  %v1003 = vadd.f32 0.0, %v1002
  %v1004 = vpop.f32.mrf.mxu0
  %v1005 = vpop.f32.mrf.mxu0
  %v1006 = vadd.f32 0.0, %v1005
  %v1007 = vpop.f32.mrf.mxu0
  %1008 = vmatprep.mubr.bf16.mxu0 0
  %1009 = vmatmul.mubr.bf16.gmra.mxu0 %v933
  %v1010 = vpop.f32.mrf.mxu0
  %v1011 = vadd.f32 0.0, %v1010
  %v1012 = vpop.f32.mrf.mxu0
  %v1013 = vpop.f32.mrf.mxu0
  %v1014 = vadd.f32 0.0, %v1013
  %v1015 = vpop.f32.mrf.mxu0
  %1016 = vmatprep.mubr.bf16.mxu0 0
  %1017 = vmatmul.mubr.bf16.gmra.mxu0 %v936
  %v1018 = vpop.f32.mrf.mxu0
  %v1019 = vadd.f32 0.0, %v1018
  %v1020 = vpop.f32.mrf.mxu0
  %v1021 = vpop.f32.mrf.mxu0
  %v1022 = vadd.f32 0.0, %v1021
  %v1023 = vpop.f32.mrf.mxu0
  %1024 = vmatprep.mubr.bf16.mxu0 0
  %1025 = vmatmul.mubr.bf16.gmra.mxu0 %v939
  %v1026 = vpop.f32.mrf.mxu0
  %v1027 = vadd.f32 0.0, %v1026
  %v1028 = vpop.f32.mrf.mxu0
  %v1029 = vpop.f32.mrf.mxu0
  %v1030 = vadd.f32 0.0, %v1029
  %v1031 = vpop.f32.mrf.mxu0
  %1032 = vmatprep.mubr.bf16.mxu0 0
  %1033 = vmatmul.mubr.bf16.gmra.mxu0 %v942
  %v1034 = vpop.f32.mrf.mxu0
  %v1035 = vadd.f32 0.0, %v1034
  %v1036 = vpop.f32.mrf.mxu0
  %v1037 = vpop.f32.mrf.mxu0
  %v1038 = vadd.f32 0.0, %v1037
  %v1039 = vpop.f32.mrf.mxu0
  %1040 = vdwg.mxu0
  %v1041 = vpack.c.bf16 %v982, %v979
  %v1042 = vpack.c.bf16 %v990, %v987
  %v1043 = vpack.c.bf16 %v998, %v995
  %v1044 = vpack.c.bf16 %v1006, %v1003
  %v1045 = vpack.c.bf16 %v1014, %v1011
  %v1046 = vpack.c.bf16 %v1022, %v1019
  %v1047 = vpack.c.bf16 %v1030, %v1027
  %v1048 = vpack.c.bf16 %v1038, %v1035
  %v1049 = vlaneseq
  %v1050 = vshrl.u32 %v1049, 7
  %v1051 = vsub.s32 0, %v1050
  %v1052 = vrot.slane %v80, %v1051
  %1053 = vmatprep.subr.bf16.mxu0 0
  %1054 = vmatpush1.bf16.msra.mxu0 %v1048
  %1055 = vmatprep.subr.bf16.mxu0 0
  %1056 = vmatpush1.bf16.msra.mxu0 %v1047
  %1057 = vmatprep.subr.bf16.mxu0 0
  %1058 = vmatpush1.bf16.msra.mxu0 %v1046
  %1059 = vmatprep.subr.bf16.mxu0 0
  %1060 = vmatpush1.bf16.msra.mxu0 %v1045
  %1061 = vmatprep.subr.bf16.mxu0 0
  %1062 = vmatpush1.bf16.msra.mxu0 %v1044
  %1063 = vmatprep.subr.bf16.mxu0 0
  %1064 = vmatpush1.bf16.msra.mxu0 %v1043
  %1065 = vmatprep.subr.bf16.mxu0 0
  %1066 = vmatpush1.bf16.msra.mxu0 %v1042
  %1067 = vmatprep.subr.bf16.mxu0 0
  %1068 = vmatpush1.bf16.msra.mxu0 %v1041
  %1069 = vmatprep.subr.bf16.mxu0 0
  %1070 = vmatpush2.bf16.msra.mxu0 0
  %1071 = vmatprep.subr.bf16.mxu0 0
  %1072 = vmatpush2.bf16.msra.mxu0 0
  %1073 = vmatprep.subr.bf16.mxu0 0
  %1074 = vmatpush2.bf16.msra.mxu0 0
  %1075 = vmatprep.subr.bf16.mxu0 0
  %1076 = vmatpush2.bf16.msra.mxu0 0
  %1077 = vmatprep.subr.bf16.mxu0 0
  %1078 = vmatpush2.bf16.msra.mxu0 0
  %1079 = vmatprep.subr.bf16.mxu0 0
  %1080 = vmatpush2.bf16.msra.mxu0 0
  %1081 = vmatprep.subr.bf16.mxu0 0
  %1082 = vmatpush2.bf16.msra.mxu0 0
  %1083 = vmatprep.subr.bf16.mxu0 0
  %1084 = vmatpush2.bf16.msra.mxu0 0
  %1085 = vmatprep.mubr.bf16.mxu0 0
  %1086 = vmatmul.mubr.bf16.gmra.mxu0 %v771
  %v1087 = vpop.f32.mrf.mxu0
  %v1088 = vadd.f32 %v1052, %v1087
  %v1089 = vpop.f32.mrf.mxu0
  %v1090 = vpop.f32.mrf.mxu0
  %v1091 = vadd.f32 %v1052, %v1090
  %v1092 = vpop.f32.mrf.mxu0
  %1093 = vmatprep.mubr.bf16.mxu0 0
  %1094 = vmatmul.mubr.bf16.gmra.mxu0 %v772
  %v1095 = vpop.f32.mrf.mxu0
  %v1096 = vadd.f32 %v1052, %v1095
  %v1097 = vpop.f32.mrf.mxu0
  %v1098 = vpop.f32.mrf.mxu0
  %v1099 = vadd.f32 %v1052, %v1098
  %v1100 = vpop.f32.mrf.mxu0
  %1101 = vmatprep.mubr.bf16.mxu0 0
  %1102 = vmatmul.mubr.bf16.gmra.mxu0 %v773
  %v1103 = vpop.f32.mrf.mxu0
  %v1104 = vadd.f32 %v1052, %v1103
  %v1105 = vpop.f32.mrf.mxu0
  %v1106 = vpop.f32.mrf.mxu0
  %v1107 = vadd.f32 %v1052, %v1106
  %v1108 = vpop.f32.mrf.mxu0
  %1109 = vmatprep.mubr.bf16.mxu0 0
  %1110 = vmatmul.mubr.bf16.gmra.mxu0 %v774
  %v1111 = vpop.f32.mrf.mxu0
  %v1112 = vadd.f32 %v1052, %v1111
  %v1113 = vpop.f32.mrf.mxu0
  %v1114 = vpop.f32.mrf.mxu0
  %v1115 = vadd.f32 %v1052, %v1114
  %v1116 = vpop.f32.mrf.mxu0
  %1117 = vmatprep.mubr.bf16.mxu0 0
  %1118 = vmatmul.mubr.bf16.gmra.mxu0 %v775
  %v1119 = vpop.f32.mrf.mxu0
  %v1120 = vadd.f32 %v1052, %v1119
  %v1121 = vpop.f32.mrf.mxu0
  %v1122 = vpop.f32.mrf.mxu0
  %v1123 = vadd.f32 %v1052, %v1122
  %v1124 = vpop.f32.mrf.mxu0
  %1125 = vmatprep.mubr.bf16.mxu0 0
  %1126 = vmatmul.mubr.bf16.gmra.mxu0 %v776
  %v1127 = vpop.f32.mrf.mxu0
  %v1128 = vadd.f32 %v1052, %v1127
  %v1129 = vpop.f32.mrf.mxu0
  %v1130 = vpop.f32.mrf.mxu0
  %v1131 = vadd.f32 %v1052, %v1130
  %v1132 = vpop.f32.mrf.mxu0
  %1133 = vmatprep.mubr.bf16.mxu0 0
  %1134 = vmatmul.mubr.bf16.gmra.mxu0 %v777
  %v1135 = vpop.f32.mrf.mxu0
  %v1136 = vadd.f32 %v1052, %v1135
  %v1137 = vpop.f32.mrf.mxu0
  %v1138 = vpop.f32.mrf.mxu0
  %v1139 = vadd.f32 %v1052, %v1138
  %v1140 = vpop.f32.mrf.mxu0
  %1141 = vmatprep.mubr.bf16.mxu0 0
  %1142 = vmatmul.mubr.bf16.gmra.mxu0 %v778
  %v1143 = vpop.f32.mrf.mxu0
  %v1144 = vadd.f32 %v1052, %v1143
  %v1145 = vpop.f32.mrf.mxu0
  %v1146 = vpop.f32.mrf.mxu0
  %v1147 = vadd.f32 %v1052, %v1146
  %v1148 = vpop.f32.mrf.mxu0
  %1149 = vdwg.mxu0
  %v1150 = vmax.f32 %v1088, 0.0
  %v1151 = vmax.f32 %v1091, 0.0
  %v1152 = vmax.f32 %v1096, 0.0
  %v1153 = vmax.f32 %v1099, 0.0
  %v1154 = vmax.f32 %v1104, 0.0
  %v1155 = vmax.f32 %v1107, 0.0
  %v1156 = vmax.f32 %v1112, 0.0
  %v1157 = vmax.f32 %v1115, 0.0
  %v1158 = vmax.f32 %v1120, 0.0
  %v1159 = vmax.f32 %v1123, 0.0
  %v1160 = vmax.f32 %v1128, 0.0
  %v1161 = vmax.f32 %v1131, 0.0
  %v1162 = vmax.f32 %v1136, 0.0
  %v1163 = vmax.f32 %v1139, 0.0
  %v1164 = vmax.f32 %v1144, 0.0
  %v1165 = vmax.f32 %v1147, 0.0
  %v1166 = vpack.c.bf16 %v1151, %v1150
  %v1167 = vpack.c.bf16 %v1153, %v1152
  %v1168 = vpack.c.bf16 %v1155, %v1154
  %v1169 = vpack.c.bf16 %v1157, %v1156
  %v1170 = vpack.c.bf16 %v1159, %v1158
  %v1171 = vpack.c.bf16 %v1161, %v1160
  %v1172 = vpack.c.bf16 %v1163, %v1162
  %v1173 = vpack.c.bf16 %v1165, %v1164
  %v1178 = vunpack.c.l.b16 %v73
  %v1179 = vunpack.c.l.b16 %v74
  %v1180 = vunpack.c.l.b16 %v75
  %v1181 = vunpack.c.l.b16 %v76
  %v1182 = vpack.c.b16 %v1179, %v1178
  %v1183 = vpack.c.b16 %v1181, %v1180
  %v1187 = vsel %vm138, %v1166, 0
  %v1190 = vsel %vm138, %v1167, 0
  %v1193 = vsel %vm138, %v1168, 0
  %v1196 = vsel %vm138, %v1169, 0
  %v1199 = vsel %vm138, %v1170, 0
  %v1202 = vsel %vm138, %v1171, 0
  %v1205 = vsel %vm138, %v1172, 0
  %v1208 = vsel %vm138, %v1173, 0
  %1210 = vmatprep.subr.bf16.mxu0 0
  %1211 = vmatpush1.bf16.msra.mxu0 0
  %1212 = vmatprep.subr.bf16.mxu0 0
  %1213 = vmatpush1.bf16.msra.mxu0 0
  %1214 = vmatprep.subr.bf16.mxu0 0
  %1215 = vmatpush1.bf16.msra.mxu0 0
  %1216 = vmatprep.subr.bf16.mxu0 0
  %1217 = vmatpush1.bf16.msra.mxu0 0
  %1218 = vmatprep.subr.bf16.mxu0 0
  %1219 = vmatpush1.bf16.msra.mxu0 0
  %1220 = vmatprep.subr.bf16.mxu0 0
  %1221 = vmatpush1.bf16.msra.mxu0 0
  %1222 = vmatprep.subr.bf16.mxu0 0
  %1223 = vmatpush1.bf16.msra.mxu0 %v1183
  %1224 = vmatprep.subr.bf16.mxu0 0
  %1225 = vmatpush1.bf16.msra.mxu0 %v1182
  %1226 = vmatprep.subr.bf16.mxu0 0
  %1227 = vmatpush2.bf16.msra.mxu0 0
  %1228 = vmatprep.subr.bf16.mxu0 0
  %1229 = vmatpush2.bf16.msra.mxu0 0
  %1230 = vmatprep.subr.bf16.mxu0 0
  %1231 = vmatpush2.bf16.msra.mxu0 0
  %1232 = vmatprep.subr.bf16.mxu0 0
  %1233 = vmatpush2.bf16.msra.mxu0 0
  %1234 = vmatprep.subr.bf16.mxu0 0
  %1235 = vmatpush2.bf16.msra.mxu0 0
  %1236 = vmatprep.subr.bf16.mxu0 0
  %1237 = vmatpush2.bf16.msra.mxu0 0
  %1238 = vmatprep.subr.bf16.mxu0 0
  %1239 = vmatpush2.bf16.msra.mxu0 0
  %1240 = vmatprep.subr.bf16.mxu0 0
  %1241 = vmatpush2.bf16.msra.mxu0 0
  %1242 = vmatprep.mubr.bf16.mxu0 0
  %1243 = vmatmul.mubr.bf16.gmra.mxu0 %v1187
  %v1244 = vpop.f32.mrf.mxu0
  %v1245 = vadd.f32 0.0, %v1244
  %v1246 = vpop.f32.mrf.mxu0
  %v1247 = vpop.f32.mrf.mxu0
  %v1248 = vadd.f32 0.0, %v1247
  %v1249 = vpop.f32.mrf.mxu0
  %1250 = vmatprep.mubr.bf16.mxu0 0
  %1251 = vmatmul.mubr.bf16.gmra.mxu0 %v1190
  %v1252 = vpop.f32.mrf.mxu0
  %v1253 = vadd.f32 0.0, %v1252
  %v1254 = vpop.f32.mrf.mxu0
  %v1255 = vpop.f32.mrf.mxu0
  %v1256 = vadd.f32 0.0, %v1255
  %v1257 = vpop.f32.mrf.mxu0
  %1258 = vmatprep.mubr.bf16.mxu0 0
  %1259 = vmatmul.mubr.bf16.gmra.mxu0 %v1193
  %v1260 = vpop.f32.mrf.mxu0
  %v1261 = vadd.f32 0.0, %v1260
  %v1262 = vpop.f32.mrf.mxu0
  %v1263 = vpop.f32.mrf.mxu0
  %v1264 = vadd.f32 0.0, %v1263
  %v1265 = vpop.f32.mrf.mxu0
  %1266 = vmatprep.mubr.bf16.mxu0 0
  %1267 = vmatmul.mubr.bf16.gmra.mxu0 %v1196
  %v1268 = vpop.f32.mrf.mxu0
  %v1269 = vadd.f32 0.0, %v1268
  %v1270 = vpop.f32.mrf.mxu0
  %v1271 = vpop.f32.mrf.mxu0
  %v1272 = vadd.f32 0.0, %v1271
  %v1273 = vpop.f32.mrf.mxu0
  %1274 = vmatprep.mubr.bf16.mxu0 0
  %1275 = vmatmul.mubr.bf16.gmra.mxu0 %v1199
  %v1276 = vpop.f32.mrf.mxu0
  %v1277 = vadd.f32 0.0, %v1276
  %v1278 = vpop.f32.mrf.mxu0
  %v1279 = vpop.f32.mrf.mxu0
  %v1280 = vadd.f32 0.0, %v1279
  %v1281 = vpop.f32.mrf.mxu0
  %1282 = vmatprep.mubr.bf16.mxu0 0
  %1283 = vmatmul.mubr.bf16.gmra.mxu0 %v1202
  %v1284 = vpop.f32.mrf.mxu0
  %v1285 = vadd.f32 0.0, %v1284
  %v1286 = vpop.f32.mrf.mxu0
  %v1287 = vpop.f32.mrf.mxu0
  %v1288 = vadd.f32 0.0, %v1287
  %v1289 = vpop.f32.mrf.mxu0
  %1290 = vmatprep.mubr.bf16.mxu0 0
  %1291 = vmatmul.mubr.bf16.gmra.mxu0 %v1205
  %v1292 = vpop.f32.mrf.mxu0
  %v1293 = vadd.f32 0.0, %v1292
  %v1294 = vpop.f32.mrf.mxu0
  %v1295 = vpop.f32.mrf.mxu0
  %v1296 = vadd.f32 0.0, %v1295
  %v1297 = vpop.f32.mrf.mxu0
  %1298 = vmatprep.mubr.bf16.mxu0 0
  %1299 = vmatmul.mubr.bf16.gmra.mxu0 %v1208
  %v1300 = vpop.f32.mrf.mxu0
  %v1301 = vadd.f32 0.0, %v1300
  %v1302 = vpop.f32.mrf.mxu0
  %v1303 = vpop.f32.mrf.mxu0
  %v1304 = vadd.f32 0.0, %v1303
  %v1305 = vpop.f32.mrf.mxu0
  %1306 = vdwg.mxu0
  %v1307 = vpack.c.bf16 %v1248, %v1245
  %v1308 = vpack.c.bf16 %v1256, %v1253
  %v1309 = vpack.c.bf16 %v1264, %v1261
  %v1310 = vpack.c.bf16 %v1272, %v1269
  %v1311 = vpack.c.bf16 %v1280, %v1277
  %v1312 = vpack.c.bf16 %v1288, %v1285
  %v1313 = vpack.c.bf16 %v1296, %v1293
  %v1314 = vpack.c.bf16 %v1304, %v1301
  %v1315 = vlaneseq
  %v1316 = vshrl.u32 %v1315, 7
  %v1317 = vsub.s32 0, %v1316
  %v1318 = vrot.slane %v81, %v1317
  %1319 = vmatprep.subr.bf16.mxu0 0
  %1320 = vmatpush1.bf16.msra.mxu0 %v1314
  %1321 = vmatprep.subr.bf16.mxu0 0
  %1322 = vmatpush1.bf16.msra.mxu0 %v1313
  %1323 = vmatprep.subr.bf16.mxu0 0
  %1324 = vmatpush1.bf16.msra.mxu0 %v1312
  %1325 = vmatprep.subr.bf16.mxu0 0
  %1326 = vmatpush1.bf16.msra.mxu0 %v1311
  %1327 = vmatprep.subr.bf16.mxu0 0
  %1328 = vmatpush1.bf16.msra.mxu0 %v1310
  %1329 = vmatprep.subr.bf16.mxu0 0
  %1330 = vmatpush1.bf16.msra.mxu0 %v1309
  %1331 = vmatprep.subr.bf16.mxu0 0
  %1332 = vmatpush1.bf16.msra.mxu0 %v1308
  %1333 = vmatprep.subr.bf16.mxu0 0
  %1334 = vmatpush1.bf16.msra.mxu0 %v1307
  %1335 = vmatprep.subr.bf16.mxu0 0
  %1336 = vmatpush2.bf16.msra.mxu0 0
  %1337 = vmatprep.subr.bf16.mxu0 0
  %1338 = vmatpush2.bf16.msra.mxu0 0
  %1339 = vmatprep.subr.bf16.mxu0 0
  %1340 = vmatpush2.bf16.msra.mxu0 0
  %1341 = vmatprep.subr.bf16.mxu0 0
  %1342 = vmatpush2.bf16.msra.mxu0 0
  %1343 = vmatprep.subr.bf16.mxu0 0
  %1344 = vmatpush2.bf16.msra.mxu0 0
  %1345 = vmatprep.subr.bf16.mxu0 0
  %1346 = vmatpush2.bf16.msra.mxu0 0
  %1347 = vmatprep.subr.bf16.mxu0 0
  %1348 = vmatpush2.bf16.msra.mxu0 0
  %1349 = vmatprep.subr.bf16.mxu0 0
  %1350 = vmatpush2.bf16.msra.mxu0 0
  %1351 = vmatprep.mubr.bf16.mxu0 0
  %1352 = vmatmul.mubr.bf16.gmra.mxu0 %v771
  %v1353 = vpop.f32.mrf.mxu0
  %v1354 = vadd.f32 %v1318, %v1353
  %v1355 = vpop.f32.mrf.mxu0
  %v1356 = vpop.f32.mrf.mxu0
  %v1357 = vadd.f32 %v1318, %v1356
  %v1358 = vpop.f32.mrf.mxu0
  %1359 = vmatprep.mubr.bf16.mxu0 0
  %1360 = vmatmul.mubr.bf16.gmra.mxu0 %v772
  %v1361 = vpop.f32.mrf.mxu0
  %v1362 = vadd.f32 %v1318, %v1361
  %v1363 = vpop.f32.mrf.mxu0
  %v1364 = vpop.f32.mrf.mxu0
  %v1365 = vadd.f32 %v1318, %v1364
  %v1366 = vpop.f32.mrf.mxu0
  %1367 = vmatprep.mubr.bf16.mxu0 0
  %1368 = vmatmul.mubr.bf16.gmra.mxu0 %v773
  %v1369 = vpop.f32.mrf.mxu0
  %v1370 = vadd.f32 %v1318, %v1369
  %v1371 = vpop.f32.mrf.mxu0
  %v1372 = vpop.f32.mrf.mxu0
  %v1373 = vadd.f32 %v1318, %v1372
  %v1374 = vpop.f32.mrf.mxu0
  %1375 = vmatprep.mubr.bf16.mxu0 0
  %1376 = vmatmul.mubr.bf16.gmra.mxu0 %v774
  %v1377 = vpop.f32.mrf.mxu0
  %v1378 = vadd.f32 %v1318, %v1377
  %v1379 = vpop.f32.mrf.mxu0
  %v1380 = vpop.f32.mrf.mxu0
  %v1381 = vadd.f32 %v1318, %v1380
  %v1382 = vpop.f32.mrf.mxu0
  %1383 = vmatprep.mubr.bf16.mxu0 0
  %1384 = vmatmul.mubr.bf16.gmra.mxu0 %v775
  %v1385 = vpop.f32.mrf.mxu0
  %v1386 = vadd.f32 %v1318, %v1385
  %v1387 = vpop.f32.mrf.mxu0
  %v1388 = vpop.f32.mrf.mxu0
  %v1389 = vadd.f32 %v1318, %v1388
  %v1390 = vpop.f32.mrf.mxu0
  %1391 = vmatprep.mubr.bf16.mxu0 0
  %1392 = vmatmul.mubr.bf16.gmra.mxu0 %v776
  %v1393 = vpop.f32.mrf.mxu0
  %v1394 = vadd.f32 %v1318, %v1393
  %v1395 = vpop.f32.mrf.mxu0
  %v1396 = vpop.f32.mrf.mxu0
  %v1397 = vadd.f32 %v1318, %v1396
  %v1398 = vpop.f32.mrf.mxu0
  %1399 = vmatprep.mubr.bf16.mxu0 0
  %1400 = vmatmul.mubr.bf16.gmra.mxu0 %v777
  %v1401 = vpop.f32.mrf.mxu0
  %v1402 = vadd.f32 %v1318, %v1401
  %v1403 = vpop.f32.mrf.mxu0
  %v1404 = vpop.f32.mrf.mxu0
  %v1405 = vadd.f32 %v1318, %v1404
  %v1406 = vpop.f32.mrf.mxu0
  %1407 = vmatprep.mubr.bf16.mxu0 0
  %1408 = vmatmul.mubr.bf16.gmra.mxu0 %v778
  %v1409 = vpop.f32.mrf.mxu0
  %v1410 = vadd.f32 %v1318, %v1409
  %v1411 = vpop.f32.mrf.mxu0
  %v1412 = vpop.f32.mrf.mxu0
  %v1413 = vadd.f32 %v1318, %v1412
  %v1414 = vpop.f32.mrf.mxu0
  %1415 = vdwg.mxu0
  %1416 = vst [vmem:[%s5] sm:$0xff] %v1354
  %1417 = vst [vmem:[%s5 + $0x8] sm:$0xff] %v1357
  %1418 = vst [vmem:[%s5 + $0x10] sm:$0xff] %v1362
  %1419 = vst [vmem:[%s5 + $0x18] sm:$0xff] %v1365
  %1420 = vst [vmem:[%s5 + $0x20] sm:$0xff] %v1370
  %1421 = vst [vmem:[%s5 + $0x28] sm:$0xff] %v1373
  %1422 = vst [vmem:[%s5 + $0x30] sm:$0xff] %v1378
  %1423 = vst [vmem:[%s5 + $0x38] sm:$0xff] %v1381
  %1424 = vst [vmem:[%s5 + $0x40] sm:$0xff] %v1386
  %1425 = vst [vmem:[%s5 + $0x48] sm:$0xff] %v1389
  %1426 = vst [vmem:[%s5 + $0x50] sm:$0xff] %v1394
  %1427 = vst [vmem:[%s5 + $0x58] sm:$0xff] %v1397
  %1428 = vst [vmem:[%s5 + $0x60] sm:$0xff] %v1402
  %1429 = vst [vmem:[%s5 + $0x68] sm:$0xff] %v1405
  %1430 = vst [vmem:[%s5 + $0x70] sm:$0xff] %v1410
  %1431 = vst [vmem:[%s5 + $0x78] sm:$0xff] %v1413
  // Predicated region
  $region22: #{pggcn_forward.1} parent=0 // pred_check
    _
  $region23: #{pggcn_forward.1} parent=0 // pred_check_branch
    %1433 = sbr.rel (0) target = $region25
  $region24: #{pggcn_forward.1} parent=0 // pred_region
    _
  $region25: #{pggcn_forward.1} parent=0 // pred_fallthru
    _
  // Predicated region
  $region26: #{pggcn_forward.1} parent=0 // pred_check
    _
  $region27: #{pggcn_forward.1} parent=0 // pred_check_branch
    %1435 = sbr.rel (0) target = $region29
  $region28: #{pggcn_forward.1} parent=0 // pred_region
    _
  $region29: #{pggcn_forward.1} parent=0 // pred_fallthru
    _

</llo_original>
